<compile_context>
chip_gen: v6e
topology: v6e:2x2x1
jax: 0.10.0
libtpu: 0.0.40
codegen_flags: <defaults>
</compile_context>

<pallas_src>
import functools

import numpy as np
import jax
import jax.numpy as jnp
from jax.experimental import pallas as pl
from jax.experimental.pallas import tpu as pltpu


def _round_up(a, m):
    return (a + m - 1) // m * m


def _cdiv(a, b):
    return -(-a // b)


# ----------------------------------------------------------------------------
# Pallas kernel: full forward pass (encoder -> heads -> decoder) fused.
# ----------------------------------------------------------------------------
def aux_latent_kernel(
    # inputs
    x_ref,                       # [tile_b, N_in]           f32
    w1_ref, b1_ref,              # encoder layer 1: [N_in, H] bf16, [1, H] f32
    w2_ref, b2_ref,              # encoder layer 2: [H, 2H] bf16,   [1, 2H] f32
    w35_ref, b35_ref,            # fused (decoder-1-fold | predefined-1 | epsilon):
                                 #   [2H, 2H+H+L] bf16, [1, 2H+H+L] f32
    w4_ref, b4_ref,              # predefined 2 (alpha): [H, P] bf16, [1, P] f32
    wd2_ref, bd2_ref,            # decoder 2: [2H, H] bf16, [1, H] f32
    wf_ref, bf_ref,              # final layer: [H, N_in] bf16, [1, N_in] f32
    r_ref, invw_ref, off_ref,    # [1, N_in] f32 each
                                 #   (invw = 1/(1.25*width), off = 0.5 - mid*invw)
    # output: packed lane-dense slab  [tile_b, OUT_W]  (out | eps | alpha | 0-pad)
    out_ref,
    *, n_in, hidden, latent, n_params,
):
    f32 = jnp.float32
    bf16 = jnp.bfloat16
    leaky = lambda v: jnp.where(v > 0, v, 0.01 * v)   # nn.LeakyReLU default slope

    x = x_ref[...].astype(bf16)

    # ---- encoder ----
    h1 = leaky(jnp.dot(x, w1_ref[...], preferred_element_type=f32) + b1_ref[...])
    enc = leaky(jnp.dot(h1.astype(bf16), w2_ref[...],
                        preferred_element_type=f32) + b2_ref[...])

    # ---- fused heads: one matmul on enc yields d1_pre | h3 | eps ----
    # (d1_pre is the eps->decoder-1 Linear folded through, since eps is a plain
    #  Linear the fold is mathematically exact; only bf16 rounding points move.)
    h35 = jnp.dot(enc.astype(bf16), w35_ref[...],
                  preferred_element_type=f32) + b35_ref[...]
    two_h = 2 * hidden
    d1 = leaky(h35[:, :two_h])                          # decoder layer 1 (folded)
    h3 = leaky(h35[:, two_h:two_h + hidden])            # predefined head hidden
    eps = h35[:, two_h + hidden:two_h + hidden + latent]  # epsilon (plain Linear)

    # ---- alpha head (alpha_prime in original naming): MXU matmul + Tanh ----
    alpha = jnp.tanh(jnp.dot(h3.astype(bf16), w4_ref[...],
                             preferred_element_type=f32) + b4_ref[...])

    # ---- rest of decoder ----
    d2 = leaky(jnp.dot(d1.astype(bf16), wd2_ref[...],
                       preferred_element_type=f32) + bd2_ref[...])
    lin = jnp.dot(d2.astype(bf16), wf_ref[...],
                  preferred_element_type=f32) + bf_ref[...]

    # ---- CustomFinalLayer xi-template term (synthetic, computed in-kernel) ----
    # undo_alpha_prime: alpha_real = 0.05 * alpha_prime + 1
    a_real = 0.05 * alpha + 1.0                       # [tb, 1]
    y = a_real * r_ref[...]                           # [tb,1] * [1,N] -> [tb,N]
    xi = jnp.sin(y) * jnp.exp(-0.1 * y)               # synthetic xi_template
    rescaled = xi * invw_ref[...] + off_ref[...]      # (xi - mid)/(1.25*w) + 0.5

    total = lin + rescaled
    # Sigmoid via tanh: exact and only one EUP op (sin/exp already use the EUP).
    sig = 0.5 * jnp.tanh(0.5 * total) + 0.5

    # ---- pack outputs into the lane-dense slab: one unmasked full-width store ----
    tile_b, out_w = out_ref.shape
    used = n_in + latent + n_params
    parts = [sig, eps, alpha]
    pad_w = out_w - used
    if pad_w > 0:
        parts.append(jnp.zeros((tile_b, pad_w), f32))
    out_ref[...] = jnp.concatenate(parts, axis=1)


# ----------------------------------------------------------------------------
# One-time weight prep (hoisted out of the per-call path)
# ----------------------------------------------------------------------------
def prepare_aux_latent(params, r, mid_poly, width_poly, matmul_dtype=jnp.bfloat16):
    """Fold / fuse / cast weights and precompute xi-rescale constants (call once)."""
    c = lambda w: w.astype(matmul_dtype)

    # Fold the epsilon->decoder-1 Linear through (f32 fold, single bf16 cast):
    #   d1_pre = enc @ (w5 @ wd1) + (b5 @ wd1 + bd1)
    w5d1 = params["w5"] @ params["wd1"]
    b5d1 = params["b5"] @ params["wd1"] + params["bd1"]

    # Fused enc-consuming matmul: columns ordered [d1_pre(2H) | h3(H) | eps(L)]
    # so the 2H-wide chunk is lane-aligned.
    w35 = jnp.concatenate([w5d1, params["w3"], params["w5"]], axis=1)
    b35 = jnp.concatenate([b5d1, params["b3"], params["b5"]], axis=1)

    inv_w = 1.0 / (1.25 * width_poly)          # reciprocal hoisted to prep
    offset = 0.5 - mid_poly * inv_w            # fold: rescaled = xi*invw + offset

    n_in = params["w1"].shape[0]
    hidden = params["w1"].shape[1]
    latent = params["w5"].shape[1]
    n_params = params["b4"].shape[1]

    weight_args = (
        c(params["w1"]), params["b1"],
        c(params["w2"]), params["b2"],
        c(w35), b35,
        c(params["w4"]), params["b4"],
        c(params["wd2"]), params["bd2"],
        c(params["wf"]), params["bf"],
        r, inv_w, offset,
    )
    dims = (n_in, hidden, latent, n_params)
    return weight_args, dims


# ----------------------------------------------------------------------------
# Forward wrapper
# ----------------------------------------------------------------------------
def _derive_tiling(batch, tile_b_max):
    """Padding-aware tiling: <8 rows of pad per step; >=2 steps when B > 8 so the
    'parallel' batch axis shards across both v7x TensorCores (no-op on v5e/v6e)."""
    steps = max(1, _cdiv(batch, tile_b_max))
    if batch > 8:
        steps = max(steps, 2)
    tile_b = _round_up(_cdiv(batch, steps), 8)
    b_pad = steps * tile_b
    return steps, tile_b, b_pad


@functools.partial(jax.jit, static_argnames=("dims", "tile_b_max"))
def _aux_latent_forward_impl(x, weight_args, dims, tile_b_max):
    n_in, hidden, latent, n_params = dims
    B = x.shape[0]

    used = n_in + latent + n_params
    # TODO(synk): out_w=128 keeps the store unmasked but writes 62% pad lanes in
    # f32; if profiling shows the kernel is HBM-write-bound, shrink out_w (or go
    # bf16) at the cost of masked stores / eps-alpha precision.
    out_w = _round_up(used, 128)

    steps, tile_b, b_pad = _derive_tiling(B, tile_b_max)
    xp = x if b_pad == B else jnp.pad(x, ((0, b_pad - B), (0, 0)))

    def resident(shape):
        # weights stay resident in VMEM: same block every grid step
        return pl.BlockSpec(shape, lambda i: (0,) * len(shape))

    in_specs = [pl.BlockSpec((tile_b, n_in), lambda i: (i, 0))] + [
        resident(a.shape) for a in weight_args
    ]

    kernel = functools.partial(
        aux_latent_kernel,
        n_in=n_in, hidden=hidden, latent=latent, n_params=n_params,
    )

    # VMEM at tile_b=1024: ~0.3 MiB in-block + ~1 MiB out-block (double-buffered)
    # + <2 MiB f32 intermediates -> far under even v5e's 16 MiB scoped default.
    # TODO(synk): if tile_b_max or hidden grow substantially, set
    # vmem_limit_bytes explicitly (v5e scoped default is 16 MiB).
    packed = pl.pallas_call(
        kernel,
        out_shape=jax.ShapeDtypeStruct((b_pad, out_w), jnp.float32),
        grid=(steps,),
        in_specs=in_specs,
        out_specs=pl.BlockSpec((tile_b, out_w), lambda i: (i, 0)),
        compiler_params=pltpu.CompilerParams(
            dimension_semantics=("parallel",),
        ),
    )(xp, *weight_args)

    out = packed[:B, :n_in]
    eps = packed[:B, n_in:n_in + latent]
    alpha = packed[:B, n_in + latent:used]
    return out, alpha, eps


def aux_latent_forward(x, prepped, *, tile_b_max=1024):
    weight_args, dims = prepped
    return _aux_latent_forward_impl(x, weight_args, dims, tile_b_max)


# ----------------------------------------------------------------------------
# Deterministic parameter init (kaiming-uniform-style bounds, as in the module)
# ----------------------------------------------------------------------------
def init_params(key, n_in, hidden, latent, model_params):
    keys = jax.random.split(key, 32)
    ki = iter(keys)

    def linear(fan_in, fan_out):
        bound = 1.0 / np.sqrt(fan_in)
        w = jax.random.uniform(next(ki), (fan_in, fan_out), jnp.float32, -bound, bound)
        b = jax.random.uniform(next(ki), (1, fan_out), jnp.float32, -bound, bound)
        return w, b

    p = {}
    p["w1"], p["b1"] = linear(n_in, hidden)                 # encoder 1
    p["w2"], p["b2"] = linear(hidden, 2 * hidden)           # encoder 2
    p["w3"], p["b3"] = linear(2 * hidden, hidden)           # predefined 1
    p["w4"], p["b4"] = linear(hidden, model_params)         # predefined 2 (alpha)
    p["w5"], p["b5"] = linear(2 * hidden, latent)           # epsilon
    p["wd1"], p["bd1"] = linear(latent, 2 * hidden)         # decoder 1
    p["wd2"], p["bd2"] = linear(2 * hidden, hidden)         # decoder 2
    p["wf"], p["bf"] = linear(hidden, n_in)                 # CustomFinalLayer
    return p


# ----------------------------------------------------------------------------
# Pure-JAX reference (original two-matmul decoder path, bf16 matmul operands)
# ----------------------------------------------------------------------------
def reference_forward(x, p, r, mid_poly, width_poly, matmul_dtype=jnp.bfloat16):
    f32 = jnp.float32
    cast = lambda a: a.astype(matmul_dtype)
    dot = lambda a, b: jnp.dot(cast(a), cast(b), preferred_element_type=f32)
    leaky = lambda v: jnp.where(v > 0, v, 0.01 * v)

    h1 = leaky(dot(x, p["w1"]) + p["b1"])
    enc = leaky(dot(h1, p["w2"]) + p["b2"])
    h3 = leaky(dot(enc, p["w3"]) + p["b3"])
    alpha = jnp.tanh(dot(h3, p["w4"]) + p["b4"])
    eps = dot(enc, p["w5"]) + p["b5"]
    d1 = leaky(dot(eps, p["wd1"]) + p["bd1"])
    d2 = leaky(dot(d1, p["wd2"]) + p["bd2"])
    lin = dot(d2, p["wf"]) + p["bf"]
    a_real = 0.05 * alpha + 1.0
    y = a_real * r
    xi = jnp.sin(y) * jnp.exp(-0.1 * y)
    rescaled = (xi - mid_poly) / (1.25 * width_poly) + 0.5
    out = 1.0 / (1.0 + jnp.exp(-(lin + rescaled)))
    return out, alpha, eps


# ----------------------------------------------------------------------------
if __name__ == "__main__":
    # Small shapes consistent with the module's forward
    B = 8              # batch
    N_IN = 32          # input_neurons
    HIDDEN = 64        # hidden_width
    LATENT = 16        # latent_width
    MODEL_PARAMS = 1   # model_params (scalar alpha per sample)

    key = jax.random.PRNGKey(0)
    k_x, k_x2, k_p = jax.random.split(key, 3)

    x = jax.random.normal(k_x, (B, N_IN), jnp.float32)
    params = init_params(k_p, N_IN, HIDDEN, LATENT, MODEL_PARAMS)

    # Synthetic independent variable r and xi-scaling polynomials
    # (replaces `xi_scaling_polynomial.txt`):
    #   width(r)  = 0.30 + 0.05 * r
    #   middle(r) = 0.10 + 0.02 * r
    r = jnp.linspace(0.5, 4.0, N_IN, dtype=jnp.float32).reshape(1, N_IN)
    width_poly = 0.30 + 0.05 * r
    mid_poly = 0.10 + 0.02 * r

    prepped = prepare_aux_latent(params, r, mid_poly, width_poly)

    def check(xb, rtol_out=5e-3, atol_out=5e-3):
        out, alpha, eps = aux_latent_forward(xb, prepped)
        jax.block_until_ready((out, alpha, eps))
        ref_out, ref_alpha, ref_eps = reference_forward(xb, params, r, mid_poly, width_poly)
        assert out.shape == (xb.shape[0], N_IN)
        assert alpha.shape == (xb.shape[0], MODEL_PARAMS)
        assert eps.shape == (xb.shape[0], LATENT)
        np.testing.assert_allclose(np.asarray(alpha), np.asarray(ref_alpha),
                                   rtol=2e-3, atol=2e-3)
        np.testing.assert_allclose(np.asarray(eps), np.asarray(ref_eps),
                                   rtol=2e-3, atol=2e-3)
        # output crosses the folded decoder-1 bf16 rounding point -> slightly looser
        np.testing.assert_allclose(np.asarray(out), np.asarray(ref_out),
                                   rtol=rtol_out, atol=atol_out)

    # single-tile path
    check(x)
    # multi-step / padding-aware path (grid >= 2, pads 300 -> 304 rows)
    x2 = jax.random.normal(k_x2, (300, N_IN), jnp.float32)
    check(x2)

    print("KERNEL_OK")
</pallas_src>

<mosaic_0001>
module attributes {stable_mosaic.version = 11 : i64} {
  func.func @aux_latent_kernel(%arg0: i32, %arg1: memref<8x32xf32, #tpu.memory_space<vmem>>, %arg2: memref<32x64xbf16, #tpu.memory_space<vmem>>, %arg3: memref<1x64xf32, #tpu.memory_space<vmem>>, %arg4: memref<64x128xbf16, #tpu.memory_space<vmem>>, %arg5: memref<1x128xf32, #tpu.memory_space<vmem>>, %arg6: memref<128x208xbf16, #tpu.memory_space<vmem>>, %arg7: memref<1x208xf32, #tpu.memory_space<vmem>>, %arg8: memref<64x1xbf16, #tpu.memory_space<vmem>>, %arg9: memref<1x1xf32, #tpu.memory_space<vmem>>, %arg10: memref<128x64xbf16, #tpu.memory_space<vmem>>, %arg11: memref<1x64xf32, #tpu.memory_space<vmem>>, %arg12: memref<64x32xbf16, #tpu.memory_space<vmem>>, %arg13: memref<1x32xf32, #tpu.memory_space<vmem>>, %arg14: memref<1x32xf32, #tpu.memory_space<vmem>>, %arg15: memref<1x32xf32, #tpu.memory_space<vmem>>, %arg16: memref<1x32xf32, #tpu.memory_space<vmem>>, %arg17: memref<8x128xf32, #tpu.memory_space<vmem>>) attributes {dimension_semantics = [#tpu.dimension_semantics<parallel>], iteration_bounds = array<i64: 1>, scalar_prefetch = 0 : i64, scratch_operands = 0 : i64, tpu.core_type = #tpu.core_type<tc>, window_params = [{transform_indices = @transform_0, window_bounds = array<i64: 8, 32>}, {pipeline_mode = #tpu.pipeline_mode<synchronous>, transform_indices = @transform_1, window_bounds = array<i64: 32, 64>}, {pipeline_mode = #tpu.pipeline_mode<synchronous>, transform_indices = @transform_2, window_bounds = array<i64: 1, 64>}, {pipeline_mode = #tpu.pipeline_mode<synchronous>, transform_indices = @transform_3, window_bounds = array<i64: 64, 128>}, {pipeline_mode = #tpu.pipeline_mode<synchronous>, transform_indices = @transform_4, window_bounds = array<i64: 1, 128>}, {pipeline_mode = #tpu.pipeline_mode<synchronous>, transform_indices = @transform_5, window_bounds = array<i64: 128, 208>}, {pipeline_mode = #tpu.pipeline_mode<synchronous>, transform_indices = @transform_6, window_bounds = array<i64: 1, 208>}, {pipeline_mode = #tpu.pipeline_mode<synchronous>, transform_indices = @transform_7, window_bounds = array<i64: 64, 1>}, {pipeline_mode = #tpu.pipeline_mode<synchronous>, transform_indices = @transform_8, window_bounds = array<i64: 1, 1>}, {pipeline_mode = #tpu.pipeline_mode<synchronous>, transform_indices = @transform_9, window_bounds = array<i64: 128, 64>}, {pipeline_mode = #tpu.pipeline_mode<synchronous>, transform_indices = @transform_10, window_bounds = array<i64: 1, 64>}, {pipeline_mode = #tpu.pipeline_mode<synchronous>, transform_indices = @transform_11, window_bounds = array<i64: 64, 32>}, {pipeline_mode = #tpu.pipeline_mode<synchronous>, transform_indices = @transform_12, window_bounds = array<i64: 1, 32>}, {pipeline_mode = #tpu.pipeline_mode<synchronous>, transform_indices = @transform_13, window_bounds = array<i64: 1, 32>}, {pipeline_mode = #tpu.pipeline_mode<synchronous>, transform_indices = @transform_14, window_bounds = array<i64: 1, 32>}, {pipeline_mode = #tpu.pipeline_mode<synchronous>, transform_indices = @transform_15, window_bounds = array<i64: 1, 32>}, {transform_indices = @transform_16, window_bounds = array<i64: 8, 128>}]} {
    %c0 = arith.constant 0 : index
    %c0_0 = arith.constant 0 : index
    %0 = vector.load %arg1[%c0, %c0_0] : memref<8x32xf32, #tpu.memory_space<vmem>>, vector<8x32xf32>
    %1 = arith.truncf %0 : vector<8x32xf32> to vector<8x32xbf16>
    %c0_1 = arith.constant 0 : index
    %c0_2 = arith.constant 0 : index
    %2 = vector.load %arg2[%c0_1, %c0_2] : memref<32x64xbf16, #tpu.memory_space<vmem>>, vector<32x64xbf16>
    %cst = arith.constant dense<0.000000e+00> : vector<8x64xf32>
    %3 = tpu.matmul %1, %2, %cst {dimension_numbers = #tpu.dot_dimension_numbers<[1], [0], [0], [1], [0, 0, 1, 1], [], []>} : vector<8x32xbf16>, vector<32x64xbf16>, vector<8x64xf32> -> vector<8x64xf32>
    %c0_3 = arith.constant 0 : index
    %c0_4 = arith.constant 0 : index
    %4 = vector.load %arg3[%c0_3, %c0_4] : memref<1x64xf32, #tpu.memory_space<vmem>>, vector<1x64xf32>
    %5 = vector.broadcast %4 : vector<1x64xf32> to vector<8x64xf32>
    %6 = arith.addf %3, %5 : vector<8x64xf32>
    %cst_5 = arith.constant 0.000000e+00 : f32
    %7 = vector.broadcast %cst_5 : f32 to vector<8x64xf32>
    %8 = arith.cmpf ogt, %6, %7 : vector<8x64xf32>
    %cst_6 = arith.constant 0.00999999977 : f32
    %9 = vector.broadcast %cst_6 : f32 to vector<8x64xf32>
    %10 = arith.mulf %9, %6 : vector<8x64xf32>
    %11 = arith.select %8, %6, %10 : vector<8x64xi1>, vector<8x64xf32>
    %12 = arith.truncf %11 : vector<8x64xf32> to vector<8x64xbf16>
    %c0_7 = arith.constant 0 : index
    %c0_8 = arith.constant 0 : index
    %13 = vector.load %arg4[%c0_7, %c0_8] : memref<64x128xbf16, #tpu.memory_space<vmem>>, vector<64x128xbf16>
    %cst_9 = arith.constant dense<0.000000e+00> : vector<8x128xf32>
    %14 = tpu.matmul %12, %13, %cst_9 {dimension_numbers = #tpu.dot_dimension_numbers<[1], [0], [0], [1], [0, 0, 1, 1], [], []>} : vector<8x64xbf16>, vector<64x128xbf16>, vector<8x128xf32> -> vector<8x128xf32>
    %c0_10 = arith.constant 0 : index
    %c0_11 = arith.constant 0 : index
    %15 = vector.load %arg5[%c0_10, %c0_11] : memref<1x128xf32, #tpu.memory_space<vmem>>, vector<1x128xf32>
    %16 = vector.broadcast %15 : vector<1x128xf32> to vector<8x128xf32>
    %17 = arith.addf %14, %16 : vector<8x128xf32>
    %cst_12 = arith.constant 0.000000e+00 : f32
    %18 = vector.broadcast %cst_12 : f32 to vector<8x128xf32>
    %19 = arith.cmpf ogt, %17, %18 : vector<8x128xf32>
    %cst_13 = arith.constant 0.00999999977 : f32
    %20 = vector.broadcast %cst_13 : f32 to vector<8x128xf32>
    %21 = arith.mulf %20, %17 : vector<8x128xf32>
    %22 = arith.select %19, %17, %21 : vector<8x128xi1>, vector<8x128xf32>
    %23 = arith.truncf %22 : vector<8x128xf32> to vector<8x128xbf16>
    %c0_14 = arith.constant 0 : index
    %c0_15 = arith.constant 0 : index
    %24 = vector.load %arg6[%c0_14, %c0_15] : memref<128x208xbf16, #tpu.memory_space<vmem>>, vector<128x208xbf16>
    %cst_16 = arith.constant dense<0.000000e+00> : vector<8x208xf32>
    %25 = tpu.matmul %23, %24, %cst_16 {dimension_numbers = #tpu.dot_dimension_numbers<[1], [0], [0], [1], [0, 0, 1, 1], [], []>} : vector<8x128xbf16>, vector<128x208xbf16>, vector<8x208xf32> -> vector<8x208xf32>
    %c0_17 = arith.constant 0 : index
    %c0_18 = arith.constant 0 : index
    %26 = vector.load %arg7[%c0_17, %c0_18] : memref<1x208xf32, #tpu.memory_space<vmem>>, vector<1x208xf32>
    %27 = vector.broadcast %26 : vector<1x208xf32> to vector<8x208xf32>
    %28 = arith.addf %25, %27 : vector<8x208xf32>
    %29 = vector.extract_strided_slice %28 {offsets = [0, 0], sizes = [8, 128], strides = [1, 1]} : vector<8x208xf32> to vector<8x128xf32>
    %cst_19 = arith.constant 0.000000e+00 : f32
    %30 = vector.broadcast %cst_19 : f32 to vector<8x128xf32>
    %31 = arith.cmpf ogt, %29, %30 : vector<8x128xf32>
    %cst_20 = arith.constant 0.00999999977 : f32
    %32 = vector.broadcast %cst_20 : f32 to vector<8x128xf32>
    %33 = arith.mulf %32, %29 : vector<8x128xf32>
    %34 = arith.select %31, %29, %33 : vector<8x128xi1>, vector<8x128xf32>
    %35 = vector.extract_strided_slice %28 {offsets = [0, 128], sizes = [8, 64], strides = [1, 1]} : vector<8x208xf32> to vector<8x64xf32>
    %cst_21 = arith.constant 0.000000e+00 : f32
    %36 = vector.broadcast %cst_21 : f32 to vector<8x64xf32>
    %37 = arith.cmpf ogt, %35, %36 : vector<8x64xf32>
    %cst_22 = arith.constant 0.00999999977 : f32
    %38 = vector.broadcast %cst_22 : f32 to vector<8x64xf32>
    %39 = arith.mulf %38, %35 : vector<8x64xf32>
    %40 = arith.select %37, %35, %39 : vector<8x64xi1>, vector<8x64xf32>
    %41 = vector.extract_strided_slice %28 {offsets = [0, 192], sizes = [8, 16], strides = [1, 1]} : vector<8x208xf32> to vector<8x16xf32>
    %42 = arith.truncf %40 : vector<8x64xf32> to vector<8x64xbf16>
    %c0_23 = arith.constant 0 : index
    %c0_24 = arith.constant 0 : index
    %43 = vector.load %arg8[%c0_23, %c0_24] : memref<64x1xbf16, #tpu.memory_space<vmem>>, vector<64x1xbf16>
    %cst_25 = arith.constant dense<0.000000e+00> : vector<8x1xf32>
    %44 = tpu.matmul %42, %43, %cst_25 {dimension_numbers = #tpu.dot_dimension_numbers<[1], [0], [0], [1], [0, 0, 1, 1], [], []>} : vector<8x64xbf16>, vector<64x1xbf16>, vector<8x1xf32> -> vector<8x1xf32>
    %c0_26 = arith.constant 0 : index
    %c0_27 = arith.constant 0 : index
    %45 = vector.load %arg9[%c0_26, %c0_27] : memref<1x1xf32, #tpu.memory_space<vmem>>, vector<1x1xf32>
    %46 = vector.broadcast %45 : vector<1x1xf32> to vector<8x1xf32>
    %47 = arith.addf %44, %46 : vector<8x1xf32>
    %48 = math.tanh %47 : vector<8x1xf32>
    %49 = arith.truncf %34 : vector<8x128xf32> to vector<8x128xbf16>
    %c0_28 = arith.constant 0 : index
    %c0_29 = arith.constant 0 : index
    %50 = vector.load %arg10[%c0_28, %c0_29] : memref<128x64xbf16, #tpu.memory_space<vmem>>, vector<128x64xbf16>
    %cst_30 = arith.constant dense<0.000000e+00> : vector<8x64xf32>
    %51 = tpu.matmul %49, %50, %cst_30 {dimension_numbers = #tpu.dot_dimension_numbers<[1], [0], [0], [1], [0, 0, 1, 1], [], []>} : vector<8x128xbf16>, vector<128x64xbf16>, vector<8x64xf32> -> vector<8x64xf32>
    %c0_31 = arith.constant 0 : index
    %c0_32 = arith.constant 0 : index
    %52 = vector.load %arg11[%c0_31, %c0_32] : memref<1x64xf32, #tpu.memory_space<vmem>>, vector<1x64xf32>
    %53 = vector.broadcast %52 : vector<1x64xf32> to vector<8x64xf32>
    %54 = arith.addf %51, %53 : vector<8x64xf32>
    %cst_33 = arith.constant 0.000000e+00 : f32
    %55 = vector.broadcast %cst_33 : f32 to vector<8x64xf32>
    %56 = arith.cmpf ogt, %54, %55 : vector<8x64xf32>
    %cst_34 = arith.constant 0.00999999977 : f32
    %57 = vector.broadcast %cst_34 : f32 to vector<8x64xf32>
    %58 = arith.mulf %57, %54 : vector<8x64xf32>
    %59 = arith.select %56, %54, %58 : vector<8x64xi1>, vector<8x64xf32>
    %60 = arith.truncf %59 : vector<8x64xf32> to vector<8x64xbf16>
    %c0_35 = arith.constant 0 : index
    %c0_36 = arith.constant 0 : index
    %61 = vector.load %arg12[%c0_35, %c0_36] : memref<64x32xbf16, #tpu.memory_space<vmem>>, vector<64x32xbf16>
    %cst_37 = arith.constant dense<0.000000e+00> : vector<8x32xf32>
    %62 = tpu.matmul %60, %61, %cst_37 {dimension_numbers = #tpu.dot_dimension_numbers<[1], [0], [0], [1], [0, 0, 1, 1], [], []>} : vector<8x64xbf16>, vector<64x32xbf16>, vector<8x32xf32> -> vector<8x32xf32>
    %c0_38 = arith.constant 0 : index
    %c0_39 = arith.constant 0 : index
    %63 = vector.load %arg13[%c0_38, %c0_39] : memref<1x32xf32, #tpu.memory_space<vmem>>, vector<1x32xf32>
    %64 = vector.broadcast %63 : vector<1x32xf32> to vector<8x32xf32>
    %65 = arith.addf %62, %64 : vector<8x32xf32>
    %cst_40 = arith.constant 5.000000e-02 : f32
    %66 = vector.broadcast %cst_40 : f32 to vector<8x1xf32>
    %67 = arith.mulf %66, %48 : vector<8x1xf32>
    %cst_41 = arith.constant 1.000000e+00 : f32
    %68 = vector.broadcast %cst_41 : f32 to vector<8x1xf32>
    %69 = arith.addf %67, %68 : vector<8x1xf32>
    %c0_42 = arith.constant 0 : index
    %c0_43 = arith.constant 0 : index
    %70 = vector.load %arg14[%c0_42, %c0_43] : memref<1x32xf32, #tpu.memory_space<vmem>>, vector<1x32xf32>
    %71 = vector.broadcast %69 : vector<8x1xf32> to vector<8x32xf32>
    %72 = vector.broadcast %70 : vector<1x32xf32> to vector<8x32xf32>
    %73 = arith.mulf %71, %72 : vector<8x32xf32>
    %74 = math.sin %73 : vector<8x32xf32>
    %cst_44 = arith.constant -1.000000e-01 : f32
    %75 = vector.broadcast %cst_44 : f32 to vector<8x32xf32>
    %76 = arith.mulf %75, %73 : vector<8x32xf32>
    %77 = math.exp %76 : vector<8x32xf32>
    %78 = arith.mulf %74, %77 : vector<8x32xf32>
    %c0_45 = arith.constant 0 : index
    %c0_46 = arith.constant 0 : index
    %79 = vector.load %arg15[%c0_45, %c0_46] : memref<1x32xf32, #tpu.memory_space<vmem>>, vector<1x32xf32>
    %80 = vector.broadcast %79 : vector<1x32xf32> to vector<8x32xf32>
    %81 = arith.mulf %78, %80 : vector<8x32xf32>
    %c0_47 = arith.constant 0 : index
    %c0_48 = arith.constant 0 : index
    %82 = vector.load %arg16[%c0_47, %c0_48] : memref<1x32xf32, #tpu.memory_space<vmem>>, vector<1x32xf32>
    %83 = vector.broadcast %82 : vector<1x32xf32> to vector<8x32xf32>
    %84 = arith.addf %81, %83 : vector<8x32xf32>
    %85 = arith.addf %65, %84 : vector<8x32xf32>
    %cst_49 = arith.constant 5.000000e-01 : f32
    %86 = vector.broadcast %cst_49 : f32 to vector<8x32xf32>
    %87 = arith.mulf %86, %85 : vector<8x32xf32>
    %88 = math.tanh %87 : vector<8x32xf32>
    %cst_50 = arith.constant 5.000000e-01 : f32
    %89 = vector.broadcast %cst_50 : f32 to vector<8x32xf32>
    %90 = arith.mulf %89, %88 : vector<8x32xf32>
    %cst_51 = arith.constant 5.000000e-01 : f32
    %91 = vector.broadcast %cst_51 : f32 to vector<8x32xf32>
    %92 = arith.addf %90, %91 : vector<8x32xf32>
    %cst_52 = arith.constant 0.000000e+00 : f32
    %93 = vector.broadcast %cst_52 : f32 to vector<8x79xf32>
    %94 = tpu.concatenate %92, %41, %48, %93 in 1 : vector<8x32xf32>, vector<8x16xf32>, vector<8x1xf32>, vector<8x79xf32> -> vector<8x128xf32>
    %c0_53 = arith.constant 0 : index
    %c0_54 = arith.constant 0 : index
    %95 = vector.load %arg17[%c0_53, %c0_54] : memref<8x128xf32, #tpu.memory_space<vmem>>, vector<8x128xf32>
    tpu.vector_store %arg17[%c0_53, %c0_54], %94 {strides = array<i32>} : memref<8x128xf32, #tpu.memory_space<vmem>>, vector<8x128xf32>,
    return
  }
  func.func @transform_0(%arg0: i32) -> (i32, i32) {
    %c0_i32 = arith.constant 0 : i32
    %c0_i32_0 = arith.constant 0 : i32
    return %arg0, %c0_i32 : i32, i32
  }
  func.func @transform_1(%arg0: i32) -> (i32, i32) {
    %c0_i32 = arith.constant 0 : i32
    %c0_i32_0 = arith.constant 0 : i32
    %c0_i32_1 = arith.constant 0 : i32
    return %c0_i32, %c0_i32_0 : i32, i32
  }
  func.func @transform_2(%arg0: i32) -> (i32, i32) {
    %c0_i32 = arith.constant 0 : i32
    %c0_i32_0 = arith.constant 0 : i32
    %c0_i32_1 = arith.constant 0 : i32
    return %c0_i32, %c0_i32_0 : i32, i32
  }
  func.func @transform_3(%arg0: i32) -> (i32, i32) {
    %c0_i32 = arith.constant 0 : i32
    %c0_i32_0 = arith.constant 0 : i32
    %c0_i32_1 = arith.constant 0 : i32
    return %c0_i32, %c0_i32_0 : i32, i32
  }
  func.func @transform_4(%arg0: i32) -> (i32, i32) {
    %c0_i32 = arith.constant 0 : i32
    %c0_i32_0 = arith.constant 0 : i32
    %c0_i32_1 = arith.constant 0 : i32
    return %c0_i32, %c0_i32_0 : i32, i32
  }
  func.func @transform_5(%arg0: i32) -> (i32, i32) {
    %c0_i32 = arith.constant 0 : i32
    %c0_i32_0 = arith.constant 0 : i32
    %c0_i32_1 = arith.constant 0 : i32
    return %c0_i32, %c0_i32_0 : i32, i32
  }
  func.func @transform_6(%arg0: i32) -> (i32, i32) {
    %c0_i32 = arith.constant 0 : i32
    %c0_i32_0 = arith.constant 0 : i32
    %c0_i32_1 = arith.constant 0 : i32
    return %c0_i32, %c0_i32_0 : i32, i32
  }
  func.func @transform_7(%arg0: i32) -> (i32, i32) {
    %c0_i32 = arith.constant 0 : i32
    %c0_i32_0 = arith.constant 0 : i32
    %c0_i32_1 = arith.constant 0 : i32
    return %c0_i32, %c0_i32_0 : i32, i32
  }
  func.func @transform_8(%arg0: i32) -> (i32, i32) {
    %c0_i32 = arith.constant 0 : i32
    %c0_i32_0 = arith.constant 0 : i32
    %c0_i32_1 = arith.constant 0 : i32
    return %c0_i32, %c0_i32_0 : i32, i32
  }
  func.func @transform_9(%arg0: i32) -> (i32, i32) {
    %c0_i32 = arith.constant 0 : i32
    %c0_i32_0 = arith.constant 0 : i32
    %c0_i32_1 = arith.constant 0 : i32
    return %c0_i32, %c0_i32_0 : i32, i32
  }
  func.func @transform_10(%arg0: i32) -> (i32, i32) {
    %c0_i32 = arith.constant 0 : i32
    %c0_i32_0 = arith.constant 0 : i32
    %c0_i32_1 = arith.constant 0 : i32
    return %c0_i32, %c0_i32_0 : i32, i32
  }
  func.func @transform_11(%arg0: i32) -> (i32, i32) {
    %c0_i32 = arith.constant 0 : i32
    %c0_i32_0 = arith.constant 0 : i32
    %c0_i32_1 = arith.constant 0 : i32
    return %c0_i32, %c0_i32_0 : i32, i32
  }
  func.func @transform_12(%arg0: i32) -> (i32, i32) {
    %c0_i32 = arith.constant 0 : i32
    %c0_i32_0 = arith.constant 0 : i32
    %c0_i32_1 = arith.constant 0 : i32
    return %c0_i32, %c0_i32_0 : i32, i32
  }
  func.func @transform_13(%arg0: i32) -> (i32, i32) {
    %c0_i32 = arith.constant 0 : i32
    %c0_i32_0 = arith.constant 0 : i32
    %c0_i32_1 = arith.constant 0 : i32
    return %c0_i32, %c0_i32_0 : i32, i32
  }
  func.func @transform_14(%arg0: i32) -> (i32, i32) {
    %c0_i32 = arith.constant 0 : i32
    %c0_i32_0 = arith.constant 0 : i32
    %c0_i32_1 = arith.constant 0 : i32
    return %c0_i32, %c0_i32_0 : i32, i32
  }
  func.func @transform_15(%arg0: i32) -> (i32, i32) {
    %c0_i32 = arith.constant 0 : i32
    %c0_i32_0 = arith.constant 0 : i32
    %c0_i32_1 = arith.constant 0 : i32
    return %c0_i32, %c0_i32_0 : i32, i32
  }
  func.func @transform_16(%arg0: i32) -> (i32, i32) {
    %c0_i32 = arith.constant 0 : i32
    %c0_i32_0 = arith.constant 0 : i32
    return %arg0, %c0_i32 : i32, i32
  }
}

</mosaic_0001>

<llo_original>
// kernel: _aux_latent_forward_impl.1
$region0: #{_aux_latent_forward_impl.1}
  #allocation0 [shape = 'u32[]', space=smem, size = 0x4, offset = 0x4, fixed_abs, tag = 'smem constant byte address 0x4 - core index']
  #allocation1 [shape = 'u32[144,128]{1,0:T(1,128)}', space=vmem, size = 0x12000, scoped, tag = 'internal scratch']
  #allocation2 [shape = 'f32[1,1]{1,0:T(1,128)S(1)}', space=vmem, size = 0x200, scoped, tag = 'scoped memory for _aux_latent_forward_impl.1']
  %s0 = inlined_call_operand.vmem [shape: f32[8,32], index: 0, kind: input, shape index: {}]
  %s1 = inlined_call_operand.vmem [shape: bf16[32,64], index: 1, kind: input, shape index: {}]
  %s2 = inlined_call_operand.vmem [shape: f32[1,64], index: 2, kind: input, shape index: {}]
  %s3 = inlined_call_operand.vmem [shape: bf16[64,128], index: 3, kind: input, shape index: {}]
  %s4 = inlined_call_operand.vmem [shape: f32[1,128], index: 4, kind: input, shape index: {}]
  %s5 = inlined_call_operand.vmem [shape: bf16[128,208], index: 5, kind: input, shape index: {}]
  %s6 = inlined_call_operand.vmem [shape: f32[1,208], index: 6, kind: input, shape index: {}]
  %s7 = inlined_call_operand.vmem [shape: bf16[64,1], index: 7, kind: input, shape index: {}]
  %s8 = inlined_call_operand.<no memory space> [shape: f32[1,1], index: 8, kind: input, shape index: {}]
  %s9 = inlined_call_operand.vmem [shape: bf16[128,64], index: 9, kind: input, shape index: {}]
  %s10 = inlined_call_operand.vmem [shape: f32[1,64], index: 10, kind: input, shape index: {}]
  %s11 = inlined_call_operand.vmem [shape: bf16[64,32], index: 11, kind: input, shape index: {}]
  %s12 = inlined_call_operand.vmem [shape: f32[1,32], index: 12, kind: input, shape index: {}]
  %s13 = inlined_call_operand.vmem [shape: f32[1,32], index: 13, kind: input, shape index: {}]
  %s14 = inlined_call_operand.vmem [shape: f32[1,32], index: 14, kind: input, shape index: {}]
  %s15 = inlined_call_operand.vmem [shape: f32[1,32], index: 15, kind: input, shape index: {}]
  %s16 = inlined_call_operand.vmem [shape: f32[8,128], index: 16, kind: output, shape index: {}]
  %s17 = sld [smem:[#allocation0]]
  $region74: #{_aux_latent_forward_impl.1} parent=0
    _
  %s19 = ssub.s32 1, %s17
  %s20 = scalar_select 0, %s19, %s17
  %v21 = vstv %s8
  %22 = vst [vmem:[#allocation2] sm:$0x1] %v21
  // Predicated region
  $region2: #{_aux_latent_forward_impl.1} parent=0 // pred_check
    _
  $region3: #{_aux_latent_forward_impl.1} parent=0 // pred_check_branch
    %24 = sbr.rel (0) target = $region5
  $region4: #{_aux_latent_forward_impl.1} parent=0 // pred_region
    _
  $region5: #{_aux_latent_forward_impl.1} parent=0 // pred_fallthru
    _
  // Predicated region
  $region6: #{_aux_latent_forward_impl.1} parent=0 // pred_check
    _
  $region7: #{_aux_latent_forward_impl.1} parent=0 // pred_check_branch
    %26 = sbr.rel (0) target = $region9
  $region8: #{_aux_latent_forward_impl.1} parent=0 // pred_region
    _
  $region9: #{_aux_latent_forward_impl.1} parent=0 // pred_fallthru
    _
  // Predicated region
  $region10: #{_aux_latent_forward_impl.1} parent=0 // pred_check
    _
  $region11: #{_aux_latent_forward_impl.1} parent=0 // pred_check_branch
    %28 = sbr.rel (0) target = $region13
  $region12: #{_aux_latent_forward_impl.1} parent=0 // pred_region
    _
  $region13: #{_aux_latent_forward_impl.1} parent=0 // pred_fallthru
    _
  // Predicated region
  $region14: #{_aux_latent_forward_impl.1} parent=0 // pred_check
    _
  $region15: #{_aux_latent_forward_impl.1} parent=0 // pred_check_branch
    %30 = sbr.rel (0) target = $region17
  $region16: #{_aux_latent_forward_impl.1} parent=0 // pred_region
    _
  $region17: #{_aux_latent_forward_impl.1} parent=0 // pred_fallthru
    _
  // Predicated region
  $region18: #{_aux_latent_forward_impl.1} parent=0 // pred_check
    _
  $region19: #{_aux_latent_forward_impl.1} parent=0 // pred_check_branch
    %32 = sbr.rel (0) target = $region21
  $region20: #{_aux_latent_forward_impl.1} parent=0 // pred_region
    _
  $region21: #{_aux_latent_forward_impl.1} parent=0 // pred_fallthru
    _
  // Predicated region
  $region22: #{_aux_latent_forward_impl.1} parent=0 // pred_check
    _
  $region23: #{_aux_latent_forward_impl.1} parent=0 // pred_check_branch
    %34 = sbr.rel (0) target = $region25
  $region24: #{_aux_latent_forward_impl.1} parent=0 // pred_region
    _
  $region25: #{_aux_latent_forward_impl.1} parent=0 // pred_fallthru
    _
  // Predicated region
  $region26: #{_aux_latent_forward_impl.1} parent=0 // pred_check
    _
  $region27: #{_aux_latent_forward_impl.1} parent=0 // pred_check_branch
    %36 = sbr.rel (0) target = $region29
  $region28: #{_aux_latent_forward_impl.1} parent=0 // pred_region
    _
  $region29: #{_aux_latent_forward_impl.1} parent=0 // pred_fallthru
    _
  // Predicated region
  $region30: #{_aux_latent_forward_impl.1} parent=0 // pred_check
    _
  $region31: #{_aux_latent_forward_impl.1} parent=0 // pred_check_branch
    %38 = sbr.rel (0) target = $region33
  $region32: #{_aux_latent_forward_impl.1} parent=0 // pred_region
    _
  $region33: #{_aux_latent_forward_impl.1} parent=0 // pred_fallthru
    _
  // Predicated region
  $region34: #{_aux_latent_forward_impl.1} parent=0 // pred_check
    _
  $region35: #{_aux_latent_forward_impl.1} parent=0 // pred_check_branch
    %40 = sbr.rel (0) target = $region37
  $region36: #{_aux_latent_forward_impl.1} parent=0 // pred_region
    _
  $region37: #{_aux_latent_forward_impl.1} parent=0 // pred_fallthru
    _
  // Predicated region
  $region38: #{_aux_latent_forward_impl.1} parent=0 // pred_check
    _
  $region39: #{_aux_latent_forward_impl.1} parent=0 // pred_check_branch
    %42 = sbr.rel (0) target = $region41
  $region40: #{_aux_latent_forward_impl.1} parent=0 // pred_region
    _
  $region41: #{_aux_latent_forward_impl.1} parent=0 // pred_fallthru
    _
  // Predicated region
  $region42: #{_aux_latent_forward_impl.1} parent=0 // pred_check
    _
  $region43: #{_aux_latent_forward_impl.1} parent=0 // pred_check_branch
    %44 = sbr.rel (0) target = $region45
  $region44: #{_aux_latent_forward_impl.1} parent=0 // pred_region
    _
  $region45: #{_aux_latent_forward_impl.1} parent=0 // pred_fallthru
    _
  // Predicated region
  $region46: #{_aux_latent_forward_impl.1} parent=0 // pred_check
    _
  $region47: #{_aux_latent_forward_impl.1} parent=0 // pred_check_branch
    %46 = sbr.rel (0) target = $region49
  $region48: #{_aux_latent_forward_impl.1} parent=0 // pred_region
    _
  $region49: #{_aux_latent_forward_impl.1} parent=0 // pred_fallthru
    _
  // Predicated region
  $region50: #{_aux_latent_forward_impl.1} parent=0 // pred_check
    _
  $region51: #{_aux_latent_forward_impl.1} parent=0 // pred_check_branch
    %48 = sbr.rel (0) target = $region53
  $region52: #{_aux_latent_forward_impl.1} parent=0 // pred_region
    _
  $region53: #{_aux_latent_forward_impl.1} parent=0 // pred_fallthru
    _
  // Predicated region
  $region54: #{_aux_latent_forward_impl.1} parent=0 // pred_check
    _
  $region55: #{_aux_latent_forward_impl.1} parent=0 // pred_check_branch
    %50 = sbr.rel (0) target = $region57
  $region56: #{_aux_latent_forward_impl.1} parent=0 // pred_region
    _
  $region57: #{_aux_latent_forward_impl.1} parent=0 // pred_fallthru
    _
  // Predicated region
  $region58: #{_aux_latent_forward_impl.1} parent=0 // pred_check
    _
  $region59: #{_aux_latent_forward_impl.1} parent=0 // pred_check_branch
    %52 = sbr.rel (0) target = $region61
  $region60: #{_aux_latent_forward_impl.1} parent=0 // pred_region
    _
  $region61: #{_aux_latent_forward_impl.1} parent=0 // pred_fallthru
    _
  // Predicated region
  $region62: #{_aux_latent_forward_impl.1} parent=0 // pred_check
    _
  $region63: #{_aux_latent_forward_impl.1} parent=0 // pred_check_branch
    %54 = sbr.rel (0) target = $region65
  $region64: #{_aux_latent_forward_impl.1} parent=0 // pred_region
    _
  $region65: #{_aux_latent_forward_impl.1} parent=0 // pred_fallthru
    _
  %v56 = vld [vmem:[%s0] sm:$0xff]
  %v57 = vpack.c.bf16 %v56, %v56
  %v58 = vld [vmem:[%s1] sm:$0xf]
  %v59 = vld [vmem:[%s1 + $0x4] sm:$0xf]
  %v60 = vld [vmem:[%s1 + $0x8] sm:$0xf]
  %v61 = vld [vmem:[%s1 + $0xc] sm:$0xf]
  %v62 = vld [vmem:[%s2] sm:$0x1]
  %v64 = vlaneseq
  %v65 = vshrl.u32 %v64, 7
  %v66 = vsub.s32 0, %v65
  %v67 = vrot.slane %v62, %v66
  %v73 = vunpack.c.l.b16 %v58
  %v74 = vunpack.c.l.b16 %v59
  %v75 = vunpack.c.l.b16 %v60
  %v76 = vunpack.c.l.b16 %v61
  %v77 = vpack.c.b16 %v74, %v73
  %v78 = vpack.c.b16 %v76, %v75
  %vm81 = vcmask 261120
  %v83 = vsel %vm81, %v57, 0
  %85 = vmatprep.subr.bf16.mxu0 0
  %86 = vmatpush1.bf16.msra.mxu0 0
  %87 = vmatprep.subr.bf16.mxu0 0
  %88 = vmatpush1.bf16.msra.mxu0 0
  %89 = vmatprep.subr.bf16.mxu0 0
  %90 = vmatpush1.bf16.msra.mxu0 0
  %91 = vmatprep.subr.bf16.mxu0 0
  %92 = vmatpush1.bf16.msra.mxu0 0
  %93 = vmatprep.subr.bf16.mxu0 0
  %94 = vmatpush1.bf16.msra.mxu0 0
  %95 = vmatprep.subr.bf16.mxu0 0
  %96 = vmatpush1.bf16.msra.mxu0 0
  %97 = vmatprep.subr.bf16.mxu0 0
  %98 = vmatpush1.bf16.msra.mxu0 %v78
  %99 = vmatprep.subr.bf16.mxu0 0
  %100 = vmatpush1.bf16.msra.mxu0 %v77
  %101 = vmatprep.subr.bf16.mxu0 0
  %102 = vmatpush2.bf16.msra.mxu0 0
  %103 = vmatprep.subr.bf16.mxu0 0
  %104 = vmatpush2.bf16.msra.mxu0 0
  %105 = vmatprep.subr.bf16.mxu0 0
  %106 = vmatpush2.bf16.msra.mxu0 0
  %107 = vmatprep.subr.bf16.mxu0 0
  %108 = vmatpush2.bf16.msra.mxu0 0
  %109 = vmatprep.subr.bf16.mxu0 0
  %110 = vmatpush2.bf16.msra.mxu0 0
  %111 = vmatprep.subr.bf16.mxu0 0
  %112 = vmatpush2.bf16.msra.mxu0 0
  %113 = vmatprep.subr.bf16.mxu0 0
  %114 = vmatpush2.bf16.msra.mxu0 0
  %115 = vmatprep.subr.bf16.mxu0 0
  %116 = vmatpush2.bf16.msra.mxu0 0
  %117 = vmatprep.mubr.bf16.mxu0 0
  %118 = vmatmul.mubr.bf16.gmra.mxu0 %v83
  %v119 = vpop.f32.mrf.mxu0
  %v120 = vadd.f32 %v67, %v119
  %v121 = vpop.f32.mrf.mxu0
  %v122 = vpop.f32.mrf.mxu0
  %v123 = vpop.f32.mrf.mxu0
  %124 = vdwg.mxu0
  %vm125 = vcmp.gt.f32.partialorder %v120, 0.0
  %v126 = vmul.f32 %v120, 0.01
  %v127 = vsel %vm125, %v120, %v126
  %v128 = vpack.c.bf16 %v127, %v127
  %v129 = vld [vmem:[%s3] sm:$0xf]
  %v130 = vld [vmem:[%s3 + $0x4] sm:$0xf]
  %v131 = vld [vmem:[%s3 + $0x8] sm:$0xf]
  %v132 = vld [vmem:[%s3 + $0xc] sm:$0xf]
  %v133 = vld [vmem:[%s3 + $0x10] sm:$0xf]
  %v134 = vld [vmem:[%s3 + $0x14] sm:$0xf]
  %v135 = vld [vmem:[%s3 + $0x18] sm:$0xf]
  %v136 = vld [vmem:[%s3 + $0x1c] sm:$0xf]
  %v137 = vld [vmem:[%s4] sm:$0x1]
  %v139 = vlaneseq
  %v140 = vshrl.u32 %v139, 7
  %v141 = vsub.s32 0, %v140
  %v142 = vrot.slane %v137, %v141
  %v152 = vunpack.c.l.b16 %v129
  %v153 = vunpack.c.l.b16 %v130
  %v154 = vunpack.c.l.b16 %v131
  %v155 = vunpack.c.l.b16 %v132
  %v156 = vunpack.c.l.b16 %v133
  %v157 = vunpack.c.l.b16 %v134
  %v158 = vunpack.c.l.b16 %v135
  %v159 = vunpack.c.l.b16 %v136
  %v160 = vpack.c.b16 %v153, %v152
  %v161 = vpack.c.b16 %v155, %v154
  %v162 = vpack.c.b16 %v157, %v156
  %v163 = vpack.c.b16 %v159, %v158
  %vm168 = vcmask 523264
  %v170 = vsel %vm168, %v128, 0
  %172 = vmatprep.subr.bf16.mxu0 0
  %173 = vmatpush1.bf16.msra.mxu0 0
  %174 = vmatprep.subr.bf16.mxu0 0
  %175 = vmatpush1.bf16.msra.mxu0 0
  %176 = vmatprep.subr.bf16.mxu0 0
  %177 = vmatpush1.bf16.msra.mxu0 0
  %178 = vmatprep.subr.bf16.mxu0 0
  %179 = vmatpush1.bf16.msra.mxu0 0
  %180 = vmatprep.subr.bf16.mxu0 0
  %181 = vmatpush1.bf16.msra.mxu0 %v163
  %182 = vmatprep.subr.bf16.mxu0 0
  %183 = vmatpush1.bf16.msra.mxu0 %v162
  %184 = vmatprep.subr.bf16.mxu0 0
  %185 = vmatpush1.bf16.msra.mxu0 %v161
  %186 = vmatprep.subr.bf16.mxu0 0
  %187 = vmatpush1.bf16.msra.mxu0 %v160
  %188 = vmatprep.subr.bf16.mxu0 0
  %189 = vmatpush2.bf16.msra.mxu0 0
  %190 = vmatprep.subr.bf16.mxu0 0
  %191 = vmatpush2.bf16.msra.mxu0 0
  %192 = vmatprep.subr.bf16.mxu0 0
  %193 = vmatpush2.bf16.msra.mxu0 0
  %194 = vmatprep.subr.bf16.mxu0 0
  %195 = vmatpush2.bf16.msra.mxu0 0
  %196 = vmatprep.subr.bf16.mxu0 0
  %197 = vmatpush2.bf16.msra.mxu0 0
  %198 = vmatprep.subr.bf16.mxu0 0
  %199 = vmatpush2.bf16.msra.mxu0 0
  %200 = vmatprep.subr.bf16.mxu0 0
  %201 = vmatpush2.bf16.msra.mxu0 0
  %202 = vmatprep.subr.bf16.mxu0 0
  %203 = vmatpush2.bf16.msra.mxu0 0
  %204 = vmatprep.mubr.bf16.mxu0 0
  %205 = vmatmul.mubr.bf16.gmra.mxu0 %v170
  %v206 = vpop.f32.mrf.mxu0
  %v207 = vadd.f32 %v142, %v206
  %v208 = vpop.f32.mrf.mxu0
  %v209 = vpop.f32.mrf.mxu0
  %v210 = vpop.f32.mrf.mxu0
  %211 = vdwg.mxu0
  %vm212 = vcmp.gt.f32.partialorder %v207, 0.0
  %v213 = vmul.f32 %v207, 0.01
  %v214 = vsel %vm212, %v207, %v213
  %v215 = vpack.c.bf16 %v214, %v214
  %v216 = vld [vmem:[%s5] sm:$0xff]
  %v217 = vld [vmem:[%s5 + $0x8] sm:$0xff]
  %v218 = vld [vmem:[%s5 + $0x10] sm:$0xff]
  %v219 = vld [vmem:[%s5 + $0x18] sm:$0xff]
  %v220 = vld [vmem:[%s5 + $0x20] sm:$0xff]
  %v221 = vld [vmem:[%s5 + $0x28] sm:$0xff]
  %v222 = vld [vmem:[%s5 + $0x30] sm:$0xff]
  %v223 = vld [vmem:[%s5 + $0x38] sm:$0xff]
  %v224 = vld [vmem:[%s5 + $0x40] sm:$0xff]
  %v225 = vld [vmem:[%s5 + $0x48] sm:$0xff]
  %v226 = vld [vmem:[%s5 + $0x50] sm:$0xff]
  %v227 = vld [vmem:[%s5 + $0x58] sm:$0xff]
  %v228 = vld [vmem:[%s5 + $0x60] sm:$0xff]
  %v229 = vld [vmem:[%s5 + $0x68] sm:$0xff]
  %v230 = vld [vmem:[%s5 + $0x70] sm:$0xff]
  %v231 = vld [vmem:[%s5 + $0x78] sm:$0xff]
  %v232 = vld [vmem:[%s6] sm:$0x3]
  %v234 = vlaneseq
  %v235 = vshrl.u32 %v234, 7
  %v236 = vsub.s32 0, %v235
  %v237 = vrot.slane %v232, %v236
  %v238 = vlaneseq
  %v239 = vshrl.u32 %v238, 7
  %v240 = vsub.s32 1, %v239
  %v241 = vrot.slane %v232, %v240
  %v260 = vunpack.c.l.b16 %v216
  %v261 = vunpack.c.h.b16 %v216
  %v262 = vunpack.c.l.b16 %v217
  %v263 = vunpack.c.h.b16 %v217
  %v264 = vunpack.c.l.b16 %v218
  %v265 = vunpack.c.h.b16 %v218
  %v266 = vunpack.c.l.b16 %v219
  %v267 = vunpack.c.h.b16 %v219
  %v268 = vunpack.c.l.b16 %v220
  %v269 = vunpack.c.h.b16 %v220
  %v270 = vunpack.c.l.b16 %v221
  %v271 = vunpack.c.h.b16 %v221
  %v272 = vunpack.c.l.b16 %v222
  %v273 = vunpack.c.h.b16 %v222
  %v274 = vunpack.c.l.b16 %v223
  %v275 = vunpack.c.h.b16 %v223
  %v276 = vunpack.c.l.b16 %v224
  %v277 = vunpack.c.h.b16 %v224
  %v278 = vunpack.c.l.b16 %v225
  %v279 = vunpack.c.h.b16 %v225
  %v280 = vunpack.c.l.b16 %v226
  %v281 = vunpack.c.h.b16 %v226
  %v282 = vunpack.c.l.b16 %v227
  %v283 = vunpack.c.h.b16 %v227
  %v284 = vunpack.c.l.b16 %v228
  %v285 = vunpack.c.h.b16 %v228
  %v286 = vunpack.c.l.b16 %v229
  %v287 = vunpack.c.h.b16 %v229
  %v288 = vunpack.c.l.b16 %v230
  %v289 = vunpack.c.h.b16 %v230
  %v290 = vunpack.c.l.b16 %v231
  %v291 = vunpack.c.h.b16 %v231
  %v292 = vpack.c.b16 %v262, %v260
  %v293 = vpack.c.b16 %v263, %v261
  %v294 = vpack.c.b16 %v266, %v264
  %v295 = vpack.c.b16 %v267, %v265
  %v296 = vpack.c.b16 %v270, %v268
  %v297 = vpack.c.b16 %v271, %v269
  %v298 = vpack.c.b16 %v274, %v272
  %v299 = vpack.c.b16 %v275, %v273
  %v300 = vpack.c.b16 %v278, %v276
  %v301 = vpack.c.b16 %v279, %v277
  %v302 = vpack.c.b16 %v282, %v280
  %v303 = vpack.c.b16 %v283, %v281
  %v304 = vpack.c.b16 %v286, %v284
  %v305 = vpack.c.b16 %v287, %v285
  %v306 = vpack.c.b16 %v290, %v288
  %v307 = vpack.c.b16 %v291, %v289
  %324 = vmatprep.subr.bf16.mxu0 %v307
  %325 = vmatpush1.bf16.msra.mxu0 %v306
  %326 = vmatprep.subr.bf16.mxu0 %v305
  %327 = vmatpush1.bf16.msra.mxu0 %v304
  %328 = vmatprep.subr.bf16.mxu0 %v303
  %329 = vmatpush1.bf16.msra.mxu0 %v302
  %330 = vmatprep.subr.bf16.mxu0 %v301
  %331 = vmatpush1.bf16.msra.mxu0 %v300
  %332 = vmatprep.subr.bf16.mxu0 %v299
  %333 = vmatpush1.bf16.msra.mxu0 %v298
  %334 = vmatprep.subr.bf16.mxu0 %v297
  %335 = vmatpush1.bf16.msra.mxu0 %v296
  %336 = vmatprep.subr.bf16.mxu0 %v295
  %337 = vmatpush1.bf16.msra.mxu0 %v294
  %338 = vmatprep.subr.bf16.mxu0 %v293
  %339 = vmatpush1.bf16.msra.mxu0 %v292
  %340 = vmatprep.subr.bf16.mxu0 0
  %341 = vmatpush2.bf16.msra.mxu0 0
  %342 = vmatprep.subr.bf16.mxu0 0
  %343 = vmatpush2.bf16.msra.mxu0 0
  %344 = vmatprep.subr.bf16.mxu0 0
  %345 = vmatpush2.bf16.msra.mxu0 0
  %346 = vmatprep.subr.bf16.mxu0 0
  %347 = vmatpush2.bf16.msra.mxu0 0
  %348 = vmatprep.subr.bf16.mxu0 0
  %349 = vmatpush2.bf16.msra.mxu0 0
  %350 = vmatprep.subr.bf16.mxu0 0
  %351 = vmatpush2.bf16.msra.mxu0 0
  %352 = vmatprep.subr.bf16.mxu0 0
  %353 = vmatpush2.bf16.msra.mxu0 0
  %354 = vmatprep.subr.bf16.mxu0 0
  %355 = vmatpush2.bf16.msra.mxu0 0
  %356 = vmatprep.mubr.bf16.mxu0 0
  %357 = vmatmul.mubr.bf16.gmra.mxu0 %v215
  %v358 = vpop.f32.mrf.mxu0
  %v359 = vadd.f32 %v237, %v358
  %v360 = vpop.f32.mrf.mxu0
  %v361 = vadd.f32 %v241, %v360
  %v362 = vpop.f32.mrf.mxu0
  %v363 = vpop.f32.mrf.mxu0
  %364 = vdwg.mxu0
  %vm365 = vcmp.gt.f32.partialorder %v359, 0.0
  %v366 = vmul.f32 %v359, 0.01
  %v367 = vsel %vm365, %v359, %v366
  %vm368 = vcmp.gt.f32.partialorder %v361, 0.0
  %v369 = vmul.f32 %v361, 0.01
  %v370 = vsel %vm368, %v361, %v369
  %v371 = vpack.c.bf16 %v370, %v370
  %v372 = vld [vmem:[%s7] sm:$0xf]
  %v373 = vld [vmem:[%s7 + $0x4] sm:$0xf]
  %v374 = vld [vmem:[%s7 + $0x8] sm:$0xf]
  %v375 = vld [vmem:[%s7 + $0xc] sm:$0xf]
  %v376 = vld [vmem:[%s7 + $0x10] sm:$0xf]
  %v377 = vld [vmem:[%s7 + $0x14] sm:$0xf]
  %v378 = vld [vmem:[%s7 + $0x18] sm:$0xf]
  %v379 = vld [vmem:[%s7 + $0x1c] sm:$0xf]
  %v380 = vld [vmem:[#allocation2] sm:$0x1]
  %v382 = vlaneseq
  %v383 = vshrl.u32 %v382, 7
  %v384 = vsub.s32 0, %v383
  %v385 = vrot.slane %v380, %v384
  %v395 = vunpack.c.l.b16 %v372
  %v396 = vunpack.c.l.b16 %v373
  %v397 = vunpack.c.l.b16 %v374
  %v398 = vunpack.c.l.b16 %v375
  %v399 = vunpack.c.l.b16 %v376
  %v400 = vunpack.c.l.b16 %v377
  %v401 = vunpack.c.l.b16 %v378
  %v402 = vunpack.c.l.b16 %v379
  %v403 = vpack.c.b16 %v396, %v395
  %v404 = vpack.c.b16 %v398, %v397
  %v405 = vpack.c.b16 %v400, %v399
  %v406 = vpack.c.b16 %v402, %v401
  %v412 = vsel %vm168, %v371, 0
  %414 = vmatprep.subr.bf16.mxu0 0
  %415 = vmatpush1.bf16.msra.mxu0 0
  %416 = vmatprep.subr.bf16.mxu0 0
  %417 = vmatpush1.bf16.msra.mxu0 0
  %418 = vmatprep.subr.bf16.mxu0 0
  %419 = vmatpush1.bf16.msra.mxu0 0
  %420 = vmatprep.subr.bf16.mxu0 0
  %421 = vmatpush1.bf16.msra.mxu0 0
  %422 = vmatprep.subr.bf16.mxu0 0
  %423 = vmatpush1.bf16.msra.mxu0 %v406
  %424 = vmatprep.subr.bf16.mxu0 0
  %425 = vmatpush1.bf16.msra.mxu0 %v405
  %426 = vmatprep.subr.bf16.mxu0 0
  %427 = vmatpush1.bf16.msra.mxu0 %v404
  %428 = vmatprep.subr.bf16.mxu0 0
  %429 = vmatpush1.bf16.msra.mxu0 %v403
  %430 = vmatprep.subr.bf16.mxu0 0
  %431 = vmatpush2.bf16.msra.mxu0 0
  %432 = vmatprep.subr.bf16.mxu0 0
  %433 = vmatpush2.bf16.msra.mxu0 0
  %434 = vmatprep.subr.bf16.mxu0 0
  %435 = vmatpush2.bf16.msra.mxu0 0
  %436 = vmatprep.subr.bf16.mxu0 0
  %437 = vmatpush2.bf16.msra.mxu0 0
  %438 = vmatprep.subr.bf16.mxu0 0
  %439 = vmatpush2.bf16.msra.mxu0 0
  %440 = vmatprep.subr.bf16.mxu0 0
  %441 = vmatpush2.bf16.msra.mxu0 0
  %442 = vmatprep.subr.bf16.mxu0 0
  %443 = vmatpush2.bf16.msra.mxu0 0
  %444 = vmatprep.subr.bf16.mxu0 0
  %445 = vmatpush2.bf16.msra.mxu0 0
  %446 = vmatprep.mubr.bf16.mxu0 0
  %447 = vmatmul.mubr.bf16.gmra.mxu0 %v412
  %v448 = vpop.f32.mrf.mxu0
  %v449 = vadd.f32 %v385, %v448
  %v450 = vpop.f32.mrf.mxu0
  %v451 = vpop.f32.mrf.mxu0
  %v452 = vpop.f32.mrf.mxu0
  %453 = vdwg.mxu0
  %v454 = vtanh.pop %v449
  %v455 = vpack.c.bf16 %v367, %v367
  %v456 = vld [vmem:[%s9] sm:$0xf]
  %v457 = vld [vmem:[%s9 + $0x4] sm:$0xf]
  %v458 = vld [vmem:[%s9 + $0x8] sm:$0xf]
  %v459 = vld [vmem:[%s9 + $0xc] sm:$0xf]
  %v460 = vld [vmem:[%s9 + $0x10] sm:$0xf]
  %v461 = vld [vmem:[%s9 + $0x14] sm:$0xf]
  %v462 = vld [vmem:[%s9 + $0x18] sm:$0xf]
  %v463 = vld [vmem:[%s9 + $0x1c] sm:$0xf]
  %v464 = vld [vmem:[%s9 + $0x20] sm:$0xf]
  %v465 = vld [vmem:[%s9 + $0x24] sm:$0xf]
  %v466 = vld [vmem:[%s9 + $0x28] sm:$0xf]
  %v467 = vld [vmem:[%s9 + $0x2c] sm:$0xf]
  %v468 = vld [vmem:[%s9 + $0x30] sm:$0xf]
  %v469 = vld [vmem:[%s9 + $0x34] sm:$0xf]
  %v470 = vld [vmem:[%s9 + $0x38] sm:$0xf]
  %v471 = vld [vmem:[%s9 + $0x3c] sm:$0xf]
  %v472 = vld [vmem:[%s10] sm:$0x1]
  %v474 = vlaneseq
  %v475 = vshrl.u32 %v474, 7
  %v476 = vsub.s32 0, %v475
  %v477 = vrot.slane %v472, %v476
  %v495 = vunpack.c.l.b16 %v456
  %v496 = vunpack.c.l.b16 %v457
  %v497 = vunpack.c.l.b16 %v458
  %v498 = vunpack.c.l.b16 %v459
  %v499 = vunpack.c.l.b16 %v460
  %v500 = vunpack.c.l.b16 %v461
  %v501 = vunpack.c.l.b16 %v462
  %v502 = vunpack.c.l.b16 %v463
  %v503 = vunpack.c.l.b16 %v464
  %v504 = vunpack.c.l.b16 %v465
  %v505 = vunpack.c.l.b16 %v466
  %v506 = vunpack.c.l.b16 %v467
  %v507 = vunpack.c.l.b16 %v468
  %v508 = vunpack.c.l.b16 %v469
  %v509 = vunpack.c.l.b16 %v470
  %v510 = vunpack.c.l.b16 %v471
  %v511 = vpack.c.b16 %v496, %v495
  %v512 = vpack.c.b16 %v498, %v497
  %v513 = vpack.c.b16 %v500, %v499
  %v514 = vpack.c.b16 %v502, %v501
  %v515 = vpack.c.b16 %v504, %v503
  %v516 = vpack.c.b16 %v506, %v505
  %v517 = vpack.c.b16 %v508, %v507
  %v518 = vpack.c.b16 %v510, %v509
  %527 = vmatprep.subr.bf16.mxu0 0
  %528 = vmatpush1.bf16.msra.mxu0 %v518
  %529 = vmatprep.subr.bf16.mxu0 0
  %530 = vmatpush1.bf16.msra.mxu0 %v517
  %531 = vmatprep.subr.bf16.mxu0 0
  %532 = vmatpush1.bf16.msra.mxu0 %v516
  %533 = vmatprep.subr.bf16.mxu0 0
  %534 = vmatpush1.bf16.msra.mxu0 %v515
  %535 = vmatprep.subr.bf16.mxu0 0
  %536 = vmatpush1.bf16.msra.mxu0 %v514
  %537 = vmatprep.subr.bf16.mxu0 0
  %538 = vmatpush1.bf16.msra.mxu0 %v513
  %539 = vmatprep.subr.bf16.mxu0 0
  %540 = vmatpush1.bf16.msra.mxu0 %v512
  %541 = vmatprep.subr.bf16.mxu0 0
  %542 = vmatpush1.bf16.msra.mxu0 %v511
  %543 = vmatprep.subr.bf16.mxu0 0
  %544 = vmatpush2.bf16.msra.mxu0 0
  %545 = vmatprep.subr.bf16.mxu0 0
  %546 = vmatpush2.bf16.msra.mxu0 0
  %547 = vmatprep.subr.bf16.mxu0 0
  %548 = vmatpush2.bf16.msra.mxu0 0
  %549 = vmatprep.subr.bf16.mxu0 0
  %550 = vmatpush2.bf16.msra.mxu0 0
  %551 = vmatprep.subr.bf16.mxu0 0
  %552 = vmatpush2.bf16.msra.mxu0 0
  %553 = vmatprep.subr.bf16.mxu0 0
  %554 = vmatpush2.bf16.msra.mxu0 0
  %555 = vmatprep.subr.bf16.mxu0 0
  %556 = vmatpush2.bf16.msra.mxu0 0
  %557 = vmatprep.subr.bf16.mxu0 0
  %558 = vmatpush2.bf16.msra.mxu0 0
  %559 = vmatprep.mubr.bf16.mxu0 0
  %560 = vmatmul.mubr.bf16.gmra.mxu0 %v455
  %v561 = vpop.f32.mrf.mxu0
  %v562 = vadd.f32 %v477, %v561
  %v563 = vpop.f32.mrf.mxu0
  %v564 = vpop.f32.mrf.mxu0
  %v565 = vpop.f32.mrf.mxu0
  %566 = vdwg.mxu0
  %vm567 = vcmp.gt.f32.partialorder %v562, 0.0
  %v568 = vmul.f32 %v562, 0.01
  %v569 = vsel %vm567, %v562, %v568
  %v570 = vpack.c.bf16 %v569, %v569
  %v571 = vld [vmem:[%s11] sm:$0xf]
  %v572 = vld [vmem:[%s11 + $0x4] sm:$0xf]
  %v573 = vld [vmem:[%s11 + $0x8] sm:$0xf]
  %v574 = vld [vmem:[%s11 + $0xc] sm:$0xf]
  %v575 = vld [vmem:[%s11 + $0x10] sm:$0xf]
  %v576 = vld [vmem:[%s11 + $0x14] sm:$0xf]
  %v577 = vld [vmem:[%s11 + $0x18] sm:$0xf]
  %v578 = vld [vmem:[%s11 + $0x1c] sm:$0xf]
  %v579 = vld [vmem:[%s12] sm:$0x1]
  %v581 = vlaneseq
  %v582 = vshrl.u32 %v581, 7
  %v583 = vsub.s32 0, %v582
  %v584 = vrot.slane %v579, %v583
  %v594 = vunpack.c.l.b16 %v571
  %v595 = vunpack.c.l.b16 %v572
  %v596 = vunpack.c.l.b16 %v573
  %v597 = vunpack.c.l.b16 %v574
  %v598 = vunpack.c.l.b16 %v575
  %v599 = vunpack.c.l.b16 %v576
  %v600 = vunpack.c.l.b16 %v577
  %v601 = vunpack.c.l.b16 %v578
  %v602 = vpack.c.b16 %v595, %v594
  %v603 = vpack.c.b16 %v597, %v596
  %v604 = vpack.c.b16 %v599, %v598
  %v605 = vpack.c.b16 %v601, %v600
  %v611 = vsel %vm168, %v570, 0
  %613 = vmatprep.subr.bf16.mxu0 0
  %614 = vmatpush1.bf16.msra.mxu0 0
  %615 = vmatprep.subr.bf16.mxu0 0
  %616 = vmatpush1.bf16.msra.mxu0 0
  %617 = vmatprep.subr.bf16.mxu0 0
  %618 = vmatpush1.bf16.msra.mxu0 0
  %619 = vmatprep.subr.bf16.mxu0 0
  %620 = vmatpush1.bf16.msra.mxu0 0
  %621 = vmatprep.subr.bf16.mxu0 0
  %622 = vmatpush1.bf16.msra.mxu0 %v605
  %623 = vmatprep.subr.bf16.mxu0 0
  %624 = vmatpush1.bf16.msra.mxu0 %v604
  %625 = vmatprep.subr.bf16.mxu0 0
  %626 = vmatpush1.bf16.msra.mxu0 %v603
  %627 = vmatprep.subr.bf16.mxu0 0
  %628 = vmatpush1.bf16.msra.mxu0 %v602
  %629 = vmatprep.subr.bf16.mxu0 0
  %630 = vmatpush2.bf16.msra.mxu0 0
  %631 = vmatprep.subr.bf16.mxu0 0
  %632 = vmatpush2.bf16.msra.mxu0 0
  %633 = vmatprep.subr.bf16.mxu0 0
  %634 = vmatpush2.bf16.msra.mxu0 0
  %635 = vmatprep.subr.bf16.mxu0 0
  %636 = vmatpush2.bf16.msra.mxu0 0
  %637 = vmatprep.subr.bf16.mxu0 0
  %638 = vmatpush2.bf16.msra.mxu0 0
  %639 = vmatprep.subr.bf16.mxu0 0
  %640 = vmatpush2.bf16.msra.mxu0 0
  %641 = vmatprep.subr.bf16.mxu0 0
  %642 = vmatpush2.bf16.msra.mxu0 0
  %643 = vmatprep.subr.bf16.mxu0 0
  %644 = vmatpush2.bf16.msra.mxu0 0
  %645 = vmatprep.mubr.bf16.mxu0 0
  %646 = vmatmul.mubr.bf16.gmra.mxu0 %v611
  %v647 = vpop.f32.mrf.mxu0
  %v648 = vadd.f32 %v584, %v647
  %v649 = vpop.f32.mrf.mxu0
  %v650 = vpop.f32.mrf.mxu0
  %v651 = vpop.f32.mrf.mxu0
  %652 = vdwg.mxu0
  %v653 = vmul.f32 %v454, 0.05
  %v654 = vadd.f32 %v653, 1.0
  %v655 = vld [vmem:[%s13] sm:$0x1]
  %657 = vset.pattern.permute.xlu0 0
  %658 = vperm.xlu0 %657, %v654
  %v659 = vpop.permute.xlu0 %658
  %v662 = vlaneseq
  %v663 = vshrl.u32 %v662, 7
  %v664 = vsub.s32 0, %v663
  %v665 = vrot.slane %v655, %v664
  %v667 = vmul.f32 %v659, %v665
  %v668 = vand.u32 2147483647, %v667
  %vm669 = vcmp.le.f32.partialorder %v668, 0.7853982
  %vm670 = vcmp.lt.s32.totalorder %v667, 0
  %v671 = vand.u32 %v667, 2139095040
  %v672 = vshrl.u32 %v671, 23
  %v673 = vsub.s32 %v672, 127
  %v674 = vand.u32 2147483647, %v667
  %v675 = vand.u32 %v674, 8388607
  %v676 = vor.u32 %v675, 8388608
  %v677 = vsub.s32 0, %v676
  %v678 = vadd.s32 %v673, 1
  %vm679 = vcmp.gt.s32.totalorder %v678, 0
  %v680 = vsel %vm679, %v678, 0
  %v681 = vshrl.u32 %v680, 5
  %v682 = vand.u32 %v680, 31
  %v683 = vsub.s32 32, %v682
  %v684 = vshrl.u32 683565275, %v683
  %v685 = vshll.u32 683565275, %v682
  %v686 = vshrl.u32 2475754826, %v683
  %v687 = vor.u32 %v685, %v686
  %v688 = vshll.u32 2475754826, %v682
  %v689 = vshrl.u32 2131351028, %v683
  %v690 = vor.u32 %v688, %v689
  %v691 = vshll.u32 2131351028, %v682
  %v692 = vshrl.u32 2102212464, %v683
  %v693 = vor.u32 %v691, %v692
  %v694 = vshll.u32 2102212464, %v682
  %v695 = vshrl.u32 920167782, %v683
  %v696 = vor.u32 %v694, %v695
  %v697 = vshll.u32 920167782, %v682
  %v698 = vshrl.u32 1326507024, %v683
  %v699 = vor.u32 %v697, %v698
  %vm700 = vcmp.lt.s32.totalorder %v681, 1
  %vm701 = vcmp.lt.s32.totalorder %v681, 2
  %vm702 = vcmp.lt.s32.totalorder %v681, 3
  %vm703 = vcmp.lt.s32.totalorder %v681, 4
  %v704 = vsel %vm700, %v684, %v687
  %v705 = vsel %vm703, %v693, 2102212464
  %v706 = vsel %vm702, %v690, %v705
  %v707 = vsel %vm701, %v704, %v706
  %v708 = vsel %vm700, %v687, %v690
  %v709 = vsel %vm703, %v696, 920167782
  %v710 = vsel %vm702, %v693, %v709
  %v711 = vsel %vm701, %v708, %v710
  %v712 = vsel %vm700, %v690, %v693
  %v713 = vsel %vm703, %v699, 1326507024
  %v714 = vsel %vm702, %v696, %v713
  %v715 = vsel %vm701, %v712, %v714
  %v716 = vshll.u32 %v676, 8
  %v717 = vmul.u32.u64.compose %v716, %v715
  %v718 = vextract.low.u32 %v717
  %v719 = vextract.high.u32 %v717
  %v720 = vmul.u32.u64.compose %v716, %v711
  %v721 = vextract.low.u32 %v720
  %v722 = vextract.high.u32 %v720
  %v723 = vmul.u32 %v716, %v707
  %v724 = vadd.s32 %v719, %v721
  %vm725 = vc.u32 %v719, %v721
  %v726 = vadd.s32 %v722, 1
  %v727 = vsel %vm725, %v726, %v722
  %v728 = vadd.s32 %v723, %v727
  %v729 = vadd.s32 %v728, 536870912
  %v730 = vshrl.u32 %v729, 30
  %v731 = vshll.u32 %v730, 30
  %v732 = vsub.s32 %v728, %v731
  %vm733 = vcmp.lt.s32.totalorder %v732, 0
  %v734 = vsub.s32 0, %v732
  %v735 = vsel %vm733, %v734, %v732
  %v736 = vclz %v735
  %v737 = vsub.s32 %v736, 2
  %vm738 = vcmp.gt.s32.totalorder 0, %v737
  %v739 = vsel %vm738, 0, %v737
  %v740 = vsub.s32 32, %v739
  %v741 = vshll.u32 %v732, %v739
  %v742 = vshrl.u32 %v724, %v740
  %v743 = vor.u32 %v741, %v742
  %v744 = vsub.s32 4294967266, %v739
  %v745 = vadd.s32 %v744, 127
  %v746 = vshll.u32 %v745, 23
  %v747 = vor.u32 4788187, %v746
  %v748 = vand.u32 2147483647, %v747
  %v750 = vcvt.s32.f32 %v743
  %v751 = vmul.f32 %v750, %v748
  %v752 = vxor.u32 %v751, 2147483648
  %v753 = vsel %vm670, %v752, %v751
  %v754 = vsub.s32 4, %v730
  %v755 = vsel %vm670, %v754, %v730
  %v756 = vsel %vm669, %v667, %v753
  %v757 = vsel %vm669, 0, %v755
  %v758 = vcosq.f32.pop %v756
  %v759 = vsinq.f32.pop %v756
  %vm760 = vweird.f32 %v667
  %v761 = vadd.s32 %v757, 3
  %v762 = vand.u32 %v761, 3
  %vm763 = vcmp.lt.s32.totalorder %v762, 2
  %vm764 = vcmp.eq.s32.totalorder %v762, 0
  %v765 = vxor.u32 %v759, 2147483648
  %v766 = vsel %vm764, %v758, %v765
  %vm767 = vcmp.eq.s32.totalorder %v762, 2
  %v768 = vxor.u32 %v758, 2147483648
  %v769 = vsel %vm767, %v768, %v759
  %v770 = vsel %vm763, %v766, %v769
  %v771 = vsel %vm760, nan, %v770
  %v772 = vmul.f32 %v667, -0.1
  %v773 = vmul.f32 %v772, 1.442695
  %v774 = vpow.pop %v773
  %v775 = vmul.f32 %v771, %v774
  %v776 = vld [vmem:[%s14] sm:$0x1]
  %v778 = vlaneseq
  %v779 = vshrl.u32 %v778, 7
  %v780 = vsub.s32 0, %v779
  %v781 = vrot.slane %v776, %v780
  %v783 = vmul.f32 %v775, %v781
  %v784 = vld [vmem:[%s15] sm:$0x1]
  %v786 = vlaneseq
  %v787 = vshrl.u32 %v786, 7
  %v788 = vsub.s32 0, %v787
  %v789 = vrot.slane %v784, %v788
  %v791 = vadd.f32 %v783, %v789
  %v792 = vadd.f32 %v648, %v791
  %v793 = vmul.f32 %v792, 0.5
  %v794 = vtanh.pop %v793
  %v795 = vmul.f32 %v794, 0.5
  %v796 = vadd.f32 %v795, 0.5
  %798 = vrot.lane.b32.xlu0 %v361, 96
  %v799 = vpop.permute.xlu0 %798
  %802 = vrot.lane.b32.xlu0 %v454, 48
  %v803 = vpop.permute.xlu0 %802
  %v805 = vsel %vm81, %v796, %v799
  %vm806 = vcmask 392192
  %v807 = vsel %vm806, %v805, %v803
  %vm808 = vcmask 400384
  %v809 = vsel %vm808, %v807, 0.0
  %810 = vst [vmem:[%s16] sm:$0xff] %v809
  // Predicated region
  $region66: #{_aux_latent_forward_impl.1} parent=0 // pred_check
    _
  $region67: #{_aux_latent_forward_impl.1} parent=0 // pred_check_branch
    %812 = sbr.rel (0) target = $region69
  $region68: #{_aux_latent_forward_impl.1} parent=0 // pred_region
    _
  $region69: #{_aux_latent_forward_impl.1} parent=0 // pred_fallthru
    _
  // Predicated region
  $region70: #{_aux_latent_forward_impl.1} parent=0 // pred_check
    _
  $region71: #{_aux_latent_forward_impl.1} parent=0 // pred_check_branch
    %814 = sbr.rel (0) target = $region73
  $region72: #{_aux_latent_forward_impl.1} parent=0 // pred_region
    _
  $region73: #{_aux_latent_forward_impl.1} parent=0 // pred_fallthru
    _

</llo_original>
